<compile_context>
chip_gen: v6e
topology: v6e:2x2x1
jax: 0.10.0
libtpu: 0.0.40
codegen_flags: <defaults>
</compile_context>

<pallas_src>
import jax
import jax.numpy as jnp
from jax.experimental import pallas as pl
from jax.experimental.pallas import tpu as pltpu

NEG_SLOPE = 0.01  # nn.LeakyReLU default


def _round_up(n, m):
    return ((n + m - 1) // m) * m


# ---------------------------------------------------------------------------
# Kernel: one tile of rows -> LeakyReLU(x_tile @ W_eff + b_eff)
# ---------------------------------------------------------------------------
def mlp_attention_kernel(x_ref, w_ref, b_ref, o_ref):
    # (tb, in_dim) @ (in_dim, out_dim) on the MXU, f32 accumulation.
    y = jnp.dot(x_ref[...], w_ref[...], preferred_element_type=jnp.float32)
    y = y + b_ref[...]                                   # f32 epilogue (VPU)
    o_ref[...] = jnp.where(y >= 0.0, y, NEG_SLOPE * y).astype(o_ref.dtype)


# ---------------------------------------------------------------------------
# Parameter folding (exact algebraic collapse of the module)
# ---------------------------------------------------------------------------
def _fold_params(params):
    win, b_in, wq, bq, wk, bk, wv, bv, gamma, wout, b_out = params
    del wq, bq, wk, bk  # dead branch: softmax over T==1 is identically 1.0
    H = win.shape[0]
    g = gamma.reshape(()).astype(jnp.float32)
    # h @ M == h + g * (h @ Wv^T)
    M = jnp.eye(H, dtype=jnp.float32) + g * wv.astype(jnp.float32).T
    w_eff = win.astype(jnp.float32).T @ M @ wout.astype(jnp.float32).T   # (in_dim, out_dim)
    b_eff = (b_in.astype(jnp.float32) @ M + g * bv.astype(jnp.float32)) \
        @ wout.astype(jnp.float32).T + b_out.astype(jnp.float32)         # (out_dim,)
    return w_eff, b_eff


def _pick_tile(B, bytes_per_row, block_b):
    # Keep double-buffered x + out streams under ~8 MiB (safe on v5e/v6e/v7x
    # default scoped VMEM) while moving as much as possible per grid step.
    vmem_budget = 8 << 20
    tb_cap = max(8, vmem_budget // (2 * max(bytes_per_row, 1)))
    tb = min(block_b, tb_cap)
    tb = min(_round_up(tb, 16), _round_up(B, 8))
    return max(8, tb)


# ---------------------------------------------------------------------------
# Wrapper
# ---------------------------------------------------------------------------
def mlp_attention(x, params, *, block_b=8192, out_dtype=None, min_pallas_rows=2048):
    """x: (B, in_dim). params: PyTorch-layout weights (out_features, in_features)."""
    B, in_dim = x.shape
    w_eff, b_eff = _fold_params(params)                  # f32, (in_dim, out_dim) / (out_dim,)
    out_dim = w_eff.shape[1]
    out_dtype = jnp.dtype(out_dtype) if out_dtype is not None else x.dtype
    if jnp.issubdtype(out_dtype, jnp.integer):
        out_dtype = jnp.dtype(jnp.float32)               # module always returns float

    # Small-problem fast path: launch + wrapper overhead dominates tiny batches.
    if B < min_pallas_rows:
        y = x.astype(jnp.float32) @ w_eff + b_eff
        return jnp.where(y >= 0.0, y, NEG_SLOPE * y).astype(out_dtype)

    bytes_per_row = in_dim * x.dtype.itemsize + out_dim * out_dtype.itemsize
    tb = _pick_tile(B, bytes_per_row, block_b)
    grid = (pl.cdiv(B, tb),)                             # ragged tail handled by Pallas

    b_row = b_eff.reshape(1, out_dim)

    cost = pl.CostEstimate(
        flops=2 * B * in_dim * out_dim,
        transcendentals=0,
        bytes_accessed=(B * in_dim * x.dtype.itemsize
                        + in_dim * out_dim * 4 + out_dim * 4
                        + B * out_dim * out_dtype.itemsize),
    )

    # TODO(synk): mark the resident w/b specs pipeline_mode=pl.Buffered(1) if
    # in_dim ever grows large enough for their double buffers to matter.
    out = pl.pallas_call(
        mlp_attention_kernel,
        grid=grid,
        in_specs=[
            pl.BlockSpec((tb, in_dim), lambda i: (i, 0)),      # streamed rows of x
            pl.BlockSpec((in_dim, out_dim), lambda i: (0, 0)), # resident folded weight
            pl.BlockSpec((1, out_dim), lambda i: (0, 0)),      # resident folded bias
        ],
        out_specs=pl.BlockSpec((tb, out_dim), lambda i: (i, 0)),
        out_shape=jax.ShapeDtypeStruct((B, out_dim), out_dtype),
        compiler_params=pltpu.CompilerParams(
            dimension_semantics=("parallel",),            # megacore on v7x
        ),
        cost_estimate=cost,
    )(x, w_eff, b_row)

    return out


# ---------------------------------------------------------------------------
# Plain-JAX reference mirroring the PyTorch forward step by step
# ---------------------------------------------------------------------------
def mlp_attention_reference(x, params):
    win, b_in, wq, bq, wk, bk, wv, bv, gamma, wout, b_out = params
    x = x.astype(jnp.float32)
    h = x @ win.T + b_in
    # Self_Attn1D on (B, C, T=1)
    q = h @ wq.T + bq
    k = h @ wk.T + bk
    energy = jnp.sum(q * k, axis=-1, keepdims=True)
    attn = jnp.exp(energy - energy)
    attn = attn / jnp.sum(attn, axis=-1, keepdims=True)     # == 1.0
    v = h @ wv.T + bv
    out = gamma[0] * (v * attn) + h
    y = out @ wout.T + b_out
    return jnp.where(y >= 0.0, y, NEG_SLOPE * y)


def init_params(key, in_dim, out_dim):
    H = max(8, in_dim)        # self.input out-features
    Hk = max(1, H // 8)       # Self_Attn1D k=8 projection dim
    ks = jax.random.split(key, 10)
    scale = 0.1
    win = scale * jax.random.normal(ks[0], (H, in_dim), jnp.float32)   # Linear(in_dim, H)
    b_in = scale * jax.random.normal(ks[1], (H,), jnp.float32)
    wq = scale * jax.random.normal(ks[2], (Hk, H), jnp.float32)        # 1x1 Conv1d(H, H//8)
    bq = scale * jax.random.normal(ks[3], (Hk,), jnp.float32)
    wk = scale * jax.random.normal(ks[4], (Hk, H), jnp.float32)        # 1x1 Conv1d(H, H//8)
    bk = scale * jax.random.normal(ks[5], (Hk,), jnp.float32)
    wv = scale * jax.random.normal(ks[6], (H, H), jnp.float32)         # 1x1 Conv1d(H, H)
    bv = scale * jax.random.normal(ks[7], (H,), jnp.float32)
    # gamma is nn.Parameter(torch.zeros(1)); use a nonzero value so the value
    # branch actually contributes to the output being checked.
    gamma = jnp.array([0.5], jnp.float32)
    wout = scale * jax.random.normal(ks[8], (out_dim, H), jnp.float32) # Linear(H, out_dim)
    b_out = scale * jax.random.normal(ks[9], (out_dim,), jnp.float32)
    return (win, b_in, wq, bq, wk, bk, wv, bv, gamma, wout, b_out)


if __name__ == "__main__":
    key = jax.random.PRNGKey(0)
    k_x, k_p = jax.random.split(key)

    batch, in_dim, out_dim = 8, 16, 8
    x = jax.random.normal(k_x, (batch, in_dim), jnp.float32)
    params = init_params(k_p, in_dim, out_dim)

    # min_pallas_rows=0 forces the Pallas path even at this tiny test size.
    y = mlp_attention(x, params, min_pallas_rows=0)
    y = jax.block_until_ready(y)

    y_ref = mlp_attention_reference(x, params)
    assert y.shape == (batch, out_dim)
    assert jnp.allclose(y, y_ref, atol=2e-5, rtol=1e-4), "mismatch vs reference"

    # Also sanity-check the small-problem fast path (plain jnp).
    y_fast = jax.block_until_ready(mlp_attention(x, params))
    assert jnp.allclose(y_fast, y_ref, atol=2e-5, rtol=1e-4), "fast path mismatch"

    print("KERNEL_OK")
</pallas_src>

<mosaic_0001>
module attributes {stable_mosaic.version = 11 : i64} {
  func.func @mlp_attention_kernel(%arg0: i32, %arg1: memref<8x16xf32, #tpu.memory_space<vmem>>, %arg2: memref<16x8xf32, #tpu.memory_space<vmem>>, %arg3: memref<1x8xf32, #tpu.memory_space<vmem>>, %arg4: memref<8x8xf32, #tpu.memory_space<vmem>>) attributes {dimension_semantics = [#tpu.dimension_semantics<parallel>], iteration_bounds = array<i64: 1>, scalar_prefetch = 0 : i64, scratch_operands = 0 : i64, tpu.core_type = #tpu.core_type<tc>, window_params = [{transform_indices = @transform_0, window_bounds = array<i64: 8, 16>}, {pipeline_mode = #tpu.pipeline_mode<synchronous>, transform_indices = @transform_1, window_bounds = array<i64: 16, 8>}, {pipeline_mode = #tpu.pipeline_mode<synchronous>, transform_indices = @transform_2, window_bounds = array<i64: 1, 8>}, {transform_indices = @transform_3, window_bounds = array<i64: 8, 8>}]} {
    %c0 = arith.constant 0 : index
    %c0_0 = arith.constant 0 : index
    %0 = vector.load %arg1[%c0, %c0_0] : memref<8x16xf32, #tpu.memory_space<vmem>>, vector<8x16xf32>
    %c0_1 = arith.constant 0 : index
    %c0_2 = arith.constant 0 : index
    %1 = vector.load %arg2[%c0_1, %c0_2] : memref<16x8xf32, #tpu.memory_space<vmem>>, vector<16x8xf32>
    %cst = arith.constant dense<0.000000e+00> : vector<8x8xf32>
    %2 = tpu.matmul %0, %1, %cst {dimension_numbers = #tpu.dot_dimension_numbers<[1], [0], [0], [1], [0, 0, 1, 1], [], []>} : vector<8x16xf32>, vector<16x8xf32>, vector<8x8xf32> -> vector<8x8xf32>
    %c0_3 = arith.constant 0 : index
    %c0_4 = arith.constant 0 : index
    %3 = vector.load %arg3[%c0_3, %c0_4] : memref<1x8xf32, #tpu.memory_space<vmem>>, vector<1x8xf32>
    %4 = vector.broadcast %3 : vector<1x8xf32> to vector<8x8xf32>
    %5 = arith.addf %2, %4 : vector<8x8xf32>
    %cst_5 = arith.constant 0.000000e+00 : f32
    %6 = vector.broadcast %cst_5 : f32 to vector<8x8xf32>
    %7 = arith.cmpf oge, %5, %6 : vector<8x8xf32>
    %cst_6 = arith.constant 0.00999999977 : f32
    %8 = vector.broadcast %cst_6 : f32 to vector<8x8xf32>
    %9 = arith.mulf %8, %5 : vector<8x8xf32>
    %10 = arith.select %7, %5, %9 : vector<8x8xi1>, vector<8x8xf32>
    %c0_7 = arith.constant 0 : index
    %c0_8 = arith.constant 0 : index
    %11 = vector.load %arg4[%c0_7, %c0_8] : memref<8x8xf32, #tpu.memory_space<vmem>>, vector<8x8xf32>
    tpu.vector_store %arg4[%c0_7, %c0_8], %10 {strides = array<i32>} : memref<8x8xf32, #tpu.memory_space<vmem>>, vector<8x8xf32>,
    return
  }
  func.func @transform_0(%arg0: i32) -> (i32, i32) {
    %c0_i32 = arith.constant 0 : i32
    %c0_i32_0 = arith.constant 0 : i32
    return %arg0, %c0_i32 : i32, i32
  }
  func.func @transform_1(%arg0: i32) -> (i32, i32) {
    %c0_i32 = arith.constant 0 : i32
    %c0_i32_0 = arith.constant 0 : i32
    %c0_i32_1 = arith.constant 0 : i32
    return %c0_i32, %c0_i32_0 : i32, i32
  }
  func.func @transform_2(%arg0: i32) -> (i32, i32) {
    %c0_i32 = arith.constant 0 : i32
    %c0_i32_0 = arith.constant 0 : i32
    %c0_i32_1 = arith.constant 0 : i32
    return %c0_i32, %c0_i32_0 : i32, i32
  }
  func.func @transform_3(%arg0: i32) -> (i32, i32) {
    %c0_i32 = arith.constant 0 : i32
    %c0_i32_0 = arith.constant 0 : i32
    return %arg0, %c0_i32 : i32, i32
  }
}

</mosaic_0001>

<llo_original>
// kernel: tpu_custom_call.1
$region0: #{tpu_custom_call.1}
  #allocation0 [shape = 'u32[]', space=smem, size = 0x4, offset = 0x4, fixed_abs, tag = 'smem constant byte address 0x4 - core index']
  #allocation1 [shape = 'u32[144,128]{1,0:T(1,128)}', space=vmem, size = 0x12000, scoped, tag = 'internal scratch']
  %s0 = inlined_call_operand.vmem [shape: f32[8,16], index: 0, kind: input, shape index: {}]
  %s1 = inlined_call_operand.vmem [shape: f32[16,8], index: 1, kind: input, shape index: {}]
  %s2 = inlined_call_operand.vmem [shape: f32[1,8], index: 2, kind: input, shape index: {}]
  %s3 = inlined_call_operand.hbm [shape: f32[8,8], index: 3, kind: output, shape index: {}]
  %s4 = sld [smem:[#allocation0]]
  $region22: #{tpu_custom_call.1} parent=0
    _
  %s6 = ssub.s32 1, %s4
  %s7 = scalar_select 0, %s6, %s4
  $region1: #{tpu_custom_call.1} parent=0
    #allocation2 [shape = 'u8[4096]{0}', space=vmem, size = 0x1000, scoped, tag = 'output window, operand 0, single buffered']
    #allocation3 [shape = 's32[1]{0}', space=sflag, size = 0x4, scoped, tag = 'scoped memory for tpu_custom_call.1']
    %8 = vsyncpa [#allocation3], 0
    // Predicated region
    $region2: #{tpu_custom_call.1} parent=1 // pred_check
      _
    $region3: #{tpu_custom_call.1} parent=1 // pred_check_branch
      %10 = sbr.rel (0) target = $region5
    $region4: #{tpu_custom_call.1} parent=1 // pred_region
      _
    $region5: #{tpu_custom_call.1} parent=1 // pred_fallthru
      _
    // Predicated region
    $region6: #{tpu_custom_call.1} parent=1 // pred_check
      _
    $region7: #{tpu_custom_call.1} parent=1 // pred_check_branch
      %12 = sbr.rel (0) target = $region9
    $region8: #{tpu_custom_call.1} parent=1 // pred_region
      _
    $region9: #{tpu_custom_call.1} parent=1 // pred_fallthru
      _
    // Predicated region
    $region10: #{tpu_custom_call.1} parent=1 // pred_check
      _
    $region11: #{tpu_custom_call.1} parent=1 // pred_check_branch
      %14 = sbr.rel (0) target = $region13
    $region12: #{tpu_custom_call.1} parent=1 // pred_region
      _
    $region13: #{tpu_custom_call.1} parent=1 // pred_fallthru
      _
    %v15 = vld [vmem:[%s0] sm:$0xff]
    %v16 = vld [vmem:[%s1] sm:$0xff]
    %v17 = vld [vmem:[%s1 + $0x8] sm:$0xff]
    %v18 = vld [vmem:[%s2] sm:$0x1]
    %v20 = vlaneseq
    %v21 = vshrl.u32 %v20, 7
    %v22 = vsub.s32 0, %v21
    %v23 = vrot.slane %v18, %v22
    %vm25 = vcmask 130048
    %v27 = vsel %vm25, %v15, 0
    %29 = vmatprep.subr.mxu0 0.0
    %30 = vmatpush1.msra.mxu0 0.0
    %31 = vmatprep.subr.mxu0 0.0
    %32 = vmatpush1.msra.mxu0 0.0
    %33 = vmatprep.subr.mxu0 0.0
    %34 = vmatpush1.msra.mxu0 0.0
    %35 = vmatprep.subr.mxu0 0.0
    %36 = vmatpush1.msra.mxu0 0.0
    %37 = vmatprep.subr.mxu0 0.0
    %38 = vmatpush1.msra.mxu0 0.0
    %39 = vmatprep.subr.mxu0 0.0
    %40 = vmatpush1.msra.mxu0 0.0
    %41 = vmatprep.subr.mxu0 0.0
    %42 = vmatpush1.msra.mxu0 0.0
    %43 = vmatprep.subr.mxu0 0.0
    %44 = vmatpush1.msra.mxu0 0.0
    %45 = vmatprep.subr.mxu0 0.0
    %46 = vmatpush1.msra.mxu0 0.0
    %47 = vmatprep.subr.mxu0 0.0
    %48 = vmatpush1.msra.mxu0 0.0
    %49 = vmatprep.subr.mxu0 0.0
    %50 = vmatpush1.msra.mxu0 0.0
    %51 = vmatprep.subr.mxu0 0.0
    %52 = vmatpush1.msra.mxu0 0.0
    %53 = vmatprep.subr.mxu0 0.0
    %54 = vmatpush1.msra.mxu0 0.0
    %55 = vmatprep.subr.mxu0 0.0
    %56 = vmatpush1.msra.mxu0 0.0
    %57 = vmatprep.subr.mxu0 0.0
    %58 = vmatpush1.msra.mxu0 %v17
    %59 = vmatprep.subr.mxu0 0.0
    %60 = vmatpush1.msra.mxu0 %v16
    %61 = vmatprep.subr.mxu0 0.0
    %62 = vmatpush2.msra.mxu0 0.0
    %63 = vmatprep.subr.mxu0 0.0
    %64 = vmatpush2.msra.mxu0 0.0
    %65 = vmatprep.subr.mxu0 0.0
    %66 = vmatpush2.msra.mxu0 0.0
    %67 = vmatprep.subr.mxu0 0.0
    %68 = vmatpush2.msra.mxu0 0.0
    %69 = vmatprep.subr.mxu0 0.0
    %70 = vmatpush2.msra.mxu0 0.0
    %71 = vmatprep.subr.mxu0 0.0
    %72 = vmatpush2.msra.mxu0 0.0
    %73 = vmatprep.subr.mxu0 0.0
    %74 = vmatpush2.msra.mxu0 0.0
    %75 = vmatprep.subr.mxu0 0.0
    %76 = vmatpush2.msra.mxu0 0.0
    %77 = vmatprep.subr.mxu0 0.0
    %78 = vmatpush2.msra.mxu0 0.0
    %79 = vmatprep.subr.mxu0 0.0
    %80 = vmatpush2.msra.mxu0 0.0
    %81 = vmatprep.subr.mxu0 0.0
    %82 = vmatpush2.msra.mxu0 0.0
    %83 = vmatprep.subr.mxu0 0.0
    %84 = vmatpush2.msra.mxu0 0.0
    %85 = vmatprep.subr.mxu0 0.0
    %86 = vmatpush2.msra.mxu0 0.0
    %87 = vmatprep.subr.mxu0 0.0
    %88 = vmatpush2.msra.mxu0 0.0
    %89 = vmatprep.subr.mxu0 0.0
    %90 = vmatpush2.msra.mxu0 0.0
    %91 = vmatprep.subr.mxu0 0.0
    %92 = vmatpush2.msra.mxu0 0.0
    %93 = vmatprep.mubr.f32.mxu0 0.0
    %94 = vmatmul.mubr.f32.gmra.mxu0 %v27
    %v95 = vpop.f32.mrf.mxu0
    %v96 = vadd.f32 %v23, %v95
    %v97 = vpop.f32.mrf.mxu0
    %98 = vdwg.mxu0
    %vm99 = vcmp.ge.f32.partialorder %v96, 0.0
    %v100 = vmul.f32 %v96, 0.01
    %v101 = vsel %vm99, %v96, %v100
    %vm102 = vcmask 64512
    %103 = vst.msk [vmem:[#allocation2] sm:$0xff] %vm102, %v101
    // Predicated region
    $region14: #{tpu_custom_call.1} parent=1 // pred_check
      _
    $region15: #{tpu_custom_call.1} parent=1 // pred_check_branch
      %105 = sbr.rel (0) target = $region17
    $region16: #{tpu_custom_call.1} parent=1 // pred_region
      %s107 = ssub.s32 128, 128
      %108 = vsyncadd [#allocation3], %s107
      %s110 = sshll.u32 [#allocation2], 4
      %s111 = int_to_ptr.vmem [resolvable:$true] %s110
      %113 = dma.vmem_to_hbm [thread:$0]  %s111, 128, %s3, [#allocation3]
    $region17: #{tpu_custom_call.1} parent=1 // pred_fallthru
      _
    // Predicated region
    $region18: #{tpu_custom_call.1} parent=1 // pred_check
      _
    $region19: #{tpu_custom_call.1} parent=1 // pred_check_branch
      %115 = sbr.rel (0) target = $region21
    $region20: #{tpu_custom_call.1} parent=1 // pred_region
      %116 = dma.done [#allocation3], 128
    $region21: #{tpu_custom_call.1} parent=1 // pred_fallthru
      _
    %117 = vsyncpa [#allocation3], 1

</llo_original>
